<compile_context>
chip_gen: v5e
topology: v5e:2x2
jax: 0.10.0
libtpu: 0.0.40
codegen_flags: <defaults>
</compile_context>

<pallas_src>
import functools

import jax
import jax.numpy as jnp
from jax import lax
from jax.experimental import pallas as pl
from jax.experimental.pallas import tpu as pltpu


# --------------------------------------------------------------------------------------
# Fused kernel: one (batch, group) step = 2 MXU matmuls + in-VMEM involution MAC.
# --------------------------------------------------------------------------------------
def _inv2d_fused_kernel(x_ref, wy_ref, by_ref, ww_ref, bw_ref, out_ref, *, K, H, W):
    # x_ref : (1, Cin, HW)      flattened spatial H*W on the lane axis
    # wy_ref: (1, gc, Cin)      reduce conv (+ folded BN) weights for this group
    # by_ref: (1, gc, 1)
    # ww_ref: (1, K*K, Cin)     span conv folded through the reduce conv
    # bw_ref: (1, K*K, 1)
    # out_ref:(1, 1, gc, HW)
    HW = H * W
    p = K // 2

    x = x_ref[0]                                                                  # (Cin, HW)

    # Pointwise convs on the MXU; y / wgt never leave VMEM.
    y = jnp.dot(wy_ref[0], x, preferred_element_type=jnp.float32) + by_ref[0]    # (gc, HW)
    wg = jnp.dot(ww_ref[0], x, preferred_element_type=jnp.float32) + bw_ref[0]   # (K2, HW)

    # Per-lane column index c = flat % W, generated in-kernel (no HBM input / DMA).
    col = lax.broadcasted_iota(jnp.int32, (1, HW), 1) % W

    # Precompute the 2p+1 column-circularly-shifted planes once; the column-wrap select
    # (and its mask) is hoisted here: 2p selects total instead of K*(K-1) in the tap loop.
    #   ycol[j][:, r*W + c] == y[:, r*W + ((c + j - p) mod W)]
    ycol = [None] * K
    ycol[p] = y
    for dj in range(1, p + 1):
        # window column offset +dj
        base = pltpu.roll(y, (HW - dj) % HW, axis=1)          # flat shift by +dj
        alt = pltpu.roll(y, W - dj, axis=1)                   # flat shift by +dj - W (wrap)
        ycol[p + dj] = jnp.where(col >= W - dj, alt, base)
        # window column offset -dj
        base = pltpu.roll(y, dj, axis=1)                      # flat shift by -dj
        alt = pltpu.roll(y, HW - W + dj, axis=1)              # flat shift by -dj + W (wrap)
        ycol[p - dj] = jnp.where(col < dj, alt, base)

    # Involution multiply-accumulate.  Row shifts are exact circular row shifts when
    # expressed as flat rolls by multiples of W, so no further wrap fix is needed.
    acc = jnp.zeros(y.shape, jnp.float32)
    for i in range(K):
        di = i - p
        for j in range(K):
            yc = ycol[j]
            win = yc if di == 0 else pltpu.roll(yc, (-di * W) % HW, axis=1)
            tap = i * K + j
            acc = acc + wg[tap:tap + 1, :] * win              # (1,HW) bcast over gc rows
    out_ref[0, 0] = acc


# --------------------------------------------------------------------------------------
# Parameter folding (eval-BN fold + span-through-reduce fusion, per-group layout).
# Done ONCE, off the hot path.
# --------------------------------------------------------------------------------------
def prepare_inv2d_params(params, *, kernel_size, group_channels, eps=1e-5):
    wr, br = params["wr"], params["br"]                       # (Cout, Cin), (Cout,)
    gamma, beta = params["gamma"], params["beta"]
    mean, var = params["mean"], params["var"]
    ws, bs = params["ws"], params["bs"]                       # (K2G, Cout), (K2G,)
    Cout, Cin = wr.shape
    K2 = kernel_size * kernel_size
    gc = group_channels
    G = Cout // gc

    g_hat = gamma / jnp.sqrt(var + eps)
    wr_eff = wr * g_hat[:, None]                              # (Cout, Cin)
    br_eff = (br - mean) * g_hat + beta                       # (Cout,)
    w_span = ws @ wr_eff                                      # (K2G, Cin)
    b_span = ws @ br_eff + bs                                 # (K2G,)

    wy = wr_eff.reshape(G, gc, Cin)
    by = br_eff.reshape(G, gc, 1)
    ww = w_span.reshape(G, K2, Cin)
    bw = b_span.reshape(G, K2, 1)
    return wy, by, ww, bw


# --------------------------------------------------------------------------------------
# Inv2d forward: one pallas_call; only free reshapes (views) around it.
# --------------------------------------------------------------------------------------
@functools.partial(jax.jit,
                   static_argnames=("kernel_size", "group_channels", "out_channels"))
def inv2d_forward(x, wy, by, ww, bw, *, kernel_size, group_channels, out_channels):
    # x: (B, Cin, H, W) float32 NCHW, stride == 1.
    B, Cin, H, W = x.shape
    K = kernel_size
    gc = group_channels
    Cout = out_channels
    G = Cout // gc
    K2 = K * K
    HW = H * W
    assert G * gc == Cout, "out_channels must be divisible by group_channels"
    # Flat-roll circular-halo trick requires the halo to be narrower than the plane.
    assert K % 2 == 1 and K // 2 < H and K // 2 < W, "kernel_size//2 must be < H and < W"

    x3 = x.reshape(B, Cin, HW)                                # free view, HW on lanes

    kern = functools.partial(_inv2d_fused_kernel, K=K, H=H, W=W)
    out4 = pl.pallas_call(
        kern,
        out_shape=jax.ShapeDtypeStruct((B, G, gc, HW), jnp.float32),
        grid=(B, G),                                          # group axis fastest:
        in_specs=[                                            #   x block stays resident
            pl.BlockSpec((1, Cin, HW), lambda b, g: (b, 0, 0)),
            pl.BlockSpec((1, gc, Cin), lambda b, g: (g, 0, 0)),
            pl.BlockSpec((1, gc, 1), lambda b, g: (g, 0, 0)),
            pl.BlockSpec((1, K2, Cin), lambda b, g: (g, 0, 0)),
            pl.BlockSpec((1, K2, 1), lambda b, g: (g, 0, 0)),
        ],
        out_specs=pl.BlockSpec((1, 1, gc, HW), lambda b, g: (b, g, 0, 0)),
        compiler_params=pltpu.CompilerParams(
            dimension_semantics=("parallel", "parallel")),
    )(x3, wy, by, ww, bw)
    return out4.reshape(B, Cout, H, W)                        # free view (G*gc == Cout)


# --------------------------------------------------------------------------------------
# Pure-JAX reference (mirrors the PyTorch forward, eval-mode BN).
# --------------------------------------------------------------------------------------
def inv2d_reference(x, params, *, kernel_size, group_channels):
    K = kernel_size
    p = K // 2
    B, Cin, H, W = x.shape
    wr, br = params["wr"], params["br"]
    gamma, beta, mean, var = params["gamma"], params["beta"], params["mean"], params["var"]
    ws, bs = params["ws"], params["bs"]
    Cout = wr.shape[0]
    G = Cout // group_channels
    eps = 1e-5

    y = jnp.einsum('oc,bchw->bohw', wr, x) + br[None, :, None, None]
    y = (y - mean[None, :, None, None]) / jnp.sqrt(var + eps)[None, :, None, None] \
        * gamma[None, :, None, None] + beta[None, :, None, None]
    wgt = jnp.einsum('oc,bchw->bohw', ws, y) + bs[None, :, None, None]

    ypad = jnp.concatenate([y[:, :, -p:, :], y, y[:, :, :p, :]], axis=2)
    ypad = jnp.concatenate([ypad[:, :, :, -p:], ypad, ypad[:, :, :, :p]], axis=3)

    wins = jnp.stack([ypad[:, :, i:i + H, j:j + W]
                      for i in range(K) for j in range(K)], axis=2)       # (B,Cout,K2,H,W)
    wins = wins.reshape(B, G, group_channels, K * K, H, W)
    wgt_r = wgt.reshape(B, G, K * K, H, W)[:, :, None]                    # (B,G,1,K2,H,W)
    out = (wgt_r * wins).sum(axis=3).reshape(B, Cout, H, W)
    return out


if __name__ == "__main__":
    B, Cin, H, W = 2, 4, 16, 16
    Cout, K, stride, group_channels = 8, 3, 1, 2
    G = Cout // group_channels
    K2G = K * K * G

    key = jax.random.PRNGKey(0)
    kx, k1, k2, k3, k4, k5, k6, k7, k8 = jax.random.split(key, 9)
    x = jax.random.normal(kx, (B, Cin, H, W), dtype=jnp.float32)
    params = dict(
        wr=0.5 * jax.random.normal(k1, (Cout, Cin), dtype=jnp.float32),    # reduce conv 1x1
        br=0.1 * jax.random.normal(k2, (Cout,), dtype=jnp.float32),
        gamma=1.0 + 0.1 * jax.random.normal(k3, (Cout,), dtype=jnp.float32),
        beta=0.1 * jax.random.normal(k4, (Cout,), dtype=jnp.float32),
        mean=0.1 * jax.random.normal(k5, (Cout,), dtype=jnp.float32),
        var=0.5 + jnp.abs(jax.random.normal(k6, (Cout,), dtype=jnp.float32)),
        ws=0.5 * jax.random.normal(k7, (K2G, Cout), dtype=jnp.float32),    # span conv 1x1
        bs=0.1 * jax.random.normal(k8, (K2G,), dtype=jnp.float32),
    )

    # Parameter folding hoisted out of the forward path (done once).
    wy, by, ww, bw = prepare_inv2d_params(params, kernel_size=K,
                                          group_channels=group_channels)

    out = inv2d_forward(x, wy, by, ww, bw, kernel_size=K,
                        group_channels=group_channels, out_channels=Cout)
    out = jax.block_until_ready(out)

    ref = inv2d_reference(x, params, kernel_size=K, group_channels=group_channels)
    assert out.shape == (B, Cout, H, W), out.shape
    assert jnp.allclose(out, ref, rtol=1e-3, atol=1e-3), float(jnp.max(jnp.abs(out - ref)))
    print("KERNEL_OK")
</pallas_src>

<mosaic_0001>
module attributes {stable_mosaic.version = 11 : i64} {
  func.func @_inv2d_fused_kernel(%arg0: i32, %arg1: i32, %arg2: memref<1x4x256xf32, #tpu.memory_space<vmem>>, %arg3: memref<1x2x4xf32, #tpu.memory_space<vmem>>, %arg4: memref<1x2x1xf32, #tpu.memory_space<vmem>>, %arg5: memref<1x9x4xf32, #tpu.memory_space<vmem>>, %arg6: memref<1x9x1xf32, #tpu.memory_space<vmem>>, %arg7: memref<1x1x2x256xf32, #tpu.memory_space<vmem>>) attributes {dimension_semantics = [#tpu.dimension_semantics<parallel>, #tpu.dimension_semantics<parallel>], iteration_bounds = array<i64: 2, 4>, scalar_prefetch = 0 : i64, scratch_operands = 0 : i64, tpu.core_type = #tpu.core_type<tc>, window_params = [{transform_indices = @transform_0, window_bounds = array<i64: 1, 4, 256>}, {transform_indices = @transform_1, window_bounds = array<i64: 1, 2, 4>}, {transform_indices = @transform_2, window_bounds = array<i64: 1, 2, 1>}, {transform_indices = @transform_3, window_bounds = array<i64: 1, 9, 4>}, {transform_indices = @transform_4, window_bounds = array<i64: 1, 9, 1>}, {transform_indices = @transform_5, window_bounds = array<i64: 1, 1, 2, 256>}]} {
    %c0 = arith.constant 0 : index
    %c0_0 = arith.constant 0 : index
    %c0_1 = arith.constant 0 : index
    %0 = vector.load %arg2[%c0, %c0_0, %c0_1] : memref<1x4x256xf32, #tpu.memory_space<vmem>>, vector<1x4x256xf32>
    %1 = vector.shape_cast %0 : vector<1x4x256xf32> to vector<4x256xf32>
    %c0_2 = arith.constant 0 : index
    %c0_3 = arith.constant 0 : index
    %c0_4 = arith.constant 0 : index
    %2 = vector.load %arg3[%c0_2, %c0_3, %c0_4] : memref<1x2x4xf32, #tpu.memory_space<vmem>>, vector<1x2x4xf32>
    %3 = vector.shape_cast %2 : vector<1x2x4xf32> to vector<2x4xf32>
    %cst = arith.constant dense<0.000000e+00> : vector<2x256xf32>
    %4 = tpu.matmul %3, %1, %cst {dimension_numbers = #tpu.dot_dimension_numbers<[1], [0], [0], [1], [0, 0, 1, 1], [], []>} : vector<2x4xf32>, vector<4x256xf32>, vector<2x256xf32> -> vector<2x256xf32>
    %c0_5 = arith.constant 0 : index
    %c0_6 = arith.constant 0 : index
    %c0_7 = arith.constant 0 : index
    %5 = vector.load %arg4[%c0_5, %c0_6, %c0_7] : memref<1x2x1xf32, #tpu.memory_space<vmem>>, vector<1x2x1xf32>
    %6 = vector.shape_cast %5 : vector<1x2x1xf32> to vector<2x1xf32>
    %7 = vector.broadcast %6 : vector<2x1xf32> to vector<2x256xf32>
    %8 = arith.addf %4, %7 : vector<2x256xf32>
    %c0_8 = arith.constant 0 : index
    %c0_9 = arith.constant 0 : index
    %c0_10 = arith.constant 0 : index
    %9 = vector.load %arg5[%c0_8, %c0_9, %c0_10] : memref<1x9x4xf32, #tpu.memory_space<vmem>>, vector<1x9x4xf32>
    %10 = vector.shape_cast %9 : vector<1x9x4xf32> to vector<9x4xf32>
    %cst_11 = arith.constant dense<0.000000e+00> : vector<9x256xf32>
    %11 = tpu.matmul %10, %1, %cst_11 {dimension_numbers = #tpu.dot_dimension_numbers<[1], [0], [0], [1], [0, 0, 1, 1], [], []>} : vector<9x4xf32>, vector<4x256xf32>, vector<9x256xf32> -> vector<9x256xf32>
    %c0_12 = arith.constant 0 : index
    %c0_13 = arith.constant 0 : index
    %c0_14 = arith.constant 0 : index
    %12 = vector.load %arg6[%c0_12, %c0_13, %c0_14] : memref<1x9x1xf32, #tpu.memory_space<vmem>>, vector<1x9x1xf32>
    %13 = vector.shape_cast %12 : vector<1x9x1xf32> to vector<9x1xf32>
    %14 = vector.broadcast %13 : vector<9x1xf32> to vector<9x256xf32>
    %15 = arith.addf %11, %14 : vector<9x256xf32>
    %16 = tpu.iota {dimensions = array<i32: 1>} : vector<1x256xi32>
    %c16_i32 = arith.constant 16 : i32
    %c0_i32 = arith.constant 0 : i32
    %17 = arith.cmpi eq, %c16_i32, %c0_i32 : i32
    %c1_i32 = arith.constant 1 : i32
    %18 = arith.select %17, %c1_i32, %c16_i32 : i32
    %19 = vector.broadcast %18 : i32 to vector<1x256xi32>
    %20 = arith.remsi %16, %19 : vector<1x256xi32>
    %c0_i32_15 = arith.constant 0 : i32
    %21 = vector.broadcast %c0_i32_15 : i32 to vector<1x256xi32>
    %22 = arith.cmpi ne, %20, %21 : vector<1x256xi32>
    %c0_i32_16 = arith.constant 0 : i32
    %23 = vector.broadcast %c0_i32_16 : i32 to vector<1x256xi32>
    %24 = arith.cmpi slt, %20, %23 : vector<1x256xi32>
    %c0_i32_17 = arith.constant 0 : i32
    %25 = arith.cmpi slt, %18, %c0_i32_17 : i32
    %26 = vector.broadcast %25 : i1 to vector<1x256xi1>
    %27 = vector.broadcast %26 : vector<1x256xi1> to vector<1x256xi1>
    %28 = arith.xori %24, %27 : vector<1x256xi1>
    %29 = arith.andi %28, %22 : vector<1x256xi1>
    %30 = vector.broadcast %18 : i32 to vector<1x256xi32>
    %31 = arith.addi %20, %30 : vector<1x256xi32>
    %32 = arith.select %29, %31, %20 : vector<1x256xi1>, vector<1x256xi32>
    %c255_i32 = arith.constant 255 : i32
    %33 = tpu.dynamic_rotate %8 by %c255_i32 dim 1 : vector<2x256xf32>, i32 -> vector<2x256xf32>
    %c15_i32 = arith.constant 15 : i32
    %34 = tpu.dynamic_rotate %8 by %c15_i32 dim 1 : vector<2x256xf32>, i32 -> vector<2x256xf32>
    %c15_i32_18 = arith.constant 15 : i32
    %35 = vector.broadcast %c15_i32_18 : i32 to vector<1x256xi32>
    %36 = arith.cmpi sge, %32, %35 : vector<1x256xi32>
    %37 = vector.shape_cast %36 : vector<1x256xi1> to vector<1x256xi1>
    %38 = vector.broadcast %37 : vector<1x256xi1> to vector<2x256xi1>
    %39 = arith.select %38, %34, %33 : vector<2x256xi1>, vector<2x256xf32>
    %c1_i32_19 = arith.constant 1 : i32
    %40 = tpu.dynamic_rotate %8 by %c1_i32_19 dim 1 : vector<2x256xf32>, i32 -> vector<2x256xf32>
    %c241_i32 = arith.constant 241 : i32
    %41 = tpu.dynamic_rotate %8 by %c241_i32 dim 1 : vector<2x256xf32>, i32 -> vector<2x256xf32>
    %c1_i32_20 = arith.constant 1 : i32
    %42 = vector.broadcast %c1_i32_20 : i32 to vector<1x256xi32>
    %43 = arith.cmpi slt, %32, %42 : vector<1x256xi32>
    %44 = vector.shape_cast %43 : vector<1x256xi1> to vector<1x256xi1>
    %45 = vector.broadcast %44 : vector<1x256xi1> to vector<2x256xi1>
    %46 = arith.select %45, %41, %40 : vector<2x256xi1>, vector<2x256xf32>
    %cst_21 = arith.constant 0.000000e+00 : f32
    %47 = vector.broadcast %cst_21 : f32 to vector<2x256xf32>
    %c16_i32_22 = arith.constant 16 : i32
    %48 = tpu.dynamic_rotate %46 by %c16_i32_22 dim 1 : vector<2x256xf32>, i32 -> vector<2x256xf32>
    %49 = vector.extract_strided_slice %15 {offsets = [0, 0], sizes = [1, 256], strides = [1, 1]} : vector<9x256xf32> to vector<1x256xf32>
    %50 = vector.broadcast %49 : vector<1x256xf32> to vector<2x256xf32>
    %51 = arith.mulf %50, %48 : vector<2x256xf32>
    %52 = arith.addf %47, %51 : vector<2x256xf32>
    %c16_i32_23 = arith.constant 16 : i32
    %53 = tpu.dynamic_rotate %8 by %c16_i32_23 dim 1 : vector<2x256xf32>, i32 -> vector<2x256xf32>
    %54 = vector.extract_strided_slice %15 {offsets = [1, 0], sizes = [1, 256], strides = [1, 1]} : vector<9x256xf32> to vector<1x256xf32>
    %55 = vector.broadcast %54 : vector<1x256xf32> to vector<2x256xf32>
    %56 = arith.mulf %55, %53 : vector<2x256xf32>
    %57 = arith.addf %52, %56 : vector<2x256xf32>
    %c16_i32_24 = arith.constant 16 : i32
    %58 = tpu.dynamic_rotate %39 by %c16_i32_24 dim 1 : vector<2x256xf32>, i32 -> vector<2x256xf32>
    %59 = vector.extract_strided_slice %15 {offsets = [2, 0], sizes = [1, 256], strides = [1, 1]} : vector<9x256xf32> to vector<1x256xf32>
    %60 = vector.broadcast %59 : vector<1x256xf32> to vector<2x256xf32>
    %61 = arith.mulf %60, %58 : vector<2x256xf32>
    %62 = arith.addf %57, %61 : vector<2x256xf32>
    %63 = vector.extract_strided_slice %15 {offsets = [3, 0], sizes = [1, 256], strides = [1, 1]} : vector<9x256xf32> to vector<1x256xf32>
    %64 = vector.broadcast %63 : vector<1x256xf32> to vector<2x256xf32>
    %65 = arith.mulf %64, %46 : vector<2x256xf32>
    %66 = arith.addf %62, %65 : vector<2x256xf32>
    %67 = vector.extract_strided_slice %15 {offsets = [4, 0], sizes = [1, 256], strides = [1, 1]} : vector<9x256xf32> to vector<1x256xf32>
    %68 = vector.broadcast %67 : vector<1x256xf32> to vector<2x256xf32>
    %69 = arith.mulf %68, %8 : vector<2x256xf32>
    %70 = arith.addf %66, %69 : vector<2x256xf32>
    %71 = vector.extract_strided_slice %15 {offsets = [5, 0], sizes = [1, 256], strides = [1, 1]} : vector<9x256xf32> to vector<1x256xf32>
    %72 = vector.broadcast %71 : vector<1x256xf32> to vector<2x256xf32>
    %73 = arith.mulf %72, %39 : vector<2x256xf32>
    %74 = arith.addf %70, %73 : vector<2x256xf32>
    %c240_i32 = arith.constant 240 : i32
    %75 = tpu.dynamic_rotate %46 by %c240_i32 dim 1 : vector<2x256xf32>, i32 -> vector<2x256xf32>
    %76 = vector.extract_strided_slice %15 {offsets = [6, 0], sizes = [1, 256], strides = [1, 1]} : vector<9x256xf32> to vector<1x256xf32>
    %77 = vector.broadcast %76 : vector<1x256xf32> to vector<2x256xf32>
    %78 = arith.mulf %77, %75 : vector<2x256xf32>
    %79 = arith.addf %74, %78 : vector<2x256xf32>
    %c240_i32_25 = arith.constant 240 : i32
    %80 = tpu.dynamic_rotate %8 by %c240_i32_25 dim 1 : vector<2x256xf32>, i32 -> vector<2x256xf32>
    %81 = vector.extract_strided_slice %15 {offsets = [7, 0], sizes = [1, 256], strides = [1, 1]} : vector<9x256xf32> to vector<1x256xf32>
    %82 = vector.broadcast %81 : vector<1x256xf32> to vector<2x256xf32>
    %83 = arith.mulf %82, %80 : vector<2x256xf32>
    %84 = arith.addf %79, %83 : vector<2x256xf32>
    %c240_i32_26 = arith.constant 240 : i32
    %85 = tpu.dynamic_rotate %39 by %c240_i32_26 dim 1 : vector<2x256xf32>, i32 -> vector<2x256xf32>
    %86 = vector.extract_strided_slice %15 {offsets = [8, 0], sizes = [1, 256], strides = [1, 1]} : vector<9x256xf32> to vector<1x256xf32>
    %87 = vector.broadcast %86 : vector<1x256xf32> to vector<2x256xf32>
    %88 = arith.mulf %87, %85 : vector<2x256xf32>
    %89 = arith.addf %84, %88 : vector<2x256xf32>
    %c0_27 = arith.constant 0 : index
    %c0_28 = arith.constant 0 : index
    %c0_29 = arith.constant 0 : index
    %c0_30 = arith.constant 0 : index
    %90 = vector.load %arg7[%c0_27, %c0_28, %c0_29, %c0_30] : memref<1x1x2x256xf32, #tpu.memory_space<vmem>>, vector<1x1x2x256xf32>
    %91 = vector.shape_cast %90 : vector<1x1x2x256xf32> to vector<2x256xf32>
    %92 = vector.shape_cast %89 : vector<2x256xf32> to vector<1x1x2x256xf32>
    tpu.vector_store %arg7[%c0_27, %c0_28, %c0_29, %c0_30], %92 {strides = array<i32>} : memref<1x1x2x256xf32, #tpu.memory_space<vmem>>, vector<1x1x2x256xf32>,
    return
  }
  func.func @transform_0(%arg0: i32, %arg1: i32) -> (i32, i32, i32) {
    %c0_i32 = arith.constant 0 : i32
    %c0_i32_0 = arith.constant 0 : i32
    %c0_i32_1 = arith.constant 0 : i32
    return %arg0, %c0_i32, %c0_i32_0 : i32, i32, i32
  }
  func.func @transform_1(%arg0: i32, %arg1: i32) -> (i32, i32, i32) {
    %c0_i32 = arith.constant 0 : i32
    %c0_i32_0 = arith.constant 0 : i32
    %c0_i32_1 = arith.constant 0 : i32
    return %arg1, %c0_i32, %c0_i32_0 : i32, i32, i32
  }
  func.func @transform_2(%arg0: i32, %arg1: i32) -> (i32, i32, i32) {
    %c0_i32 = arith.constant 0 : i32
    %c0_i32_0 = arith.constant 0 : i32
    %c0_i32_1 = arith.constant 0 : i32
    return %arg1, %c0_i32, %c0_i32_0 : i32, i32, i32
  }
  func.func @transform_3(%arg0: i32, %arg1: i32) -> (i32, i32, i32) {
    %c0_i32 = arith.constant 0 : i32
    %c0_i32_0 = arith.constant 0 : i32
    %c0_i32_1 = arith.constant 0 : i32
    return %arg1, %c0_i32, %c0_i32_0 : i32, i32, i32
  }
  func.func @transform_4(%arg0: i32, %arg1: i32) -> (i32, i32, i32) {
    %c0_i32 = arith.constant 0 : i32
    %c0_i32_0 = arith.constant 0 : i32
    %c0_i32_1 = arith.constant 0 : i32
    return %arg1, %c0_i32, %c0_i32_0 : i32, i32, i32
  }
  func.func @transform_5(%arg0: i32, %arg1: i32) -> (i32, i32, i32, i32) {
    %c0_i32 = arith.constant 0 : i32
    %c0_i32_0 = arith.constant 0 : i32
    %c0_i32_1 = arith.constant 0 : i32
    return %arg0, %arg1, %c0_i32, %c0_i32_0 : i32, i32, i32, i32
  }
}

</mosaic_0001>

<llo_original>
// kernel: inv2d_forward.1
$region0: #{inv2d_forward.1}
  #allocation0 [shape = 'u32[]', space=smem, size = 0x4, offset = 0x4, fixed_abs, tag = 'smem constant byte address 0x4 - core index']
  #allocation1 [shape = 'u32[72,128]{1,0:T(1,128)}', space=vmem, size = 0x9000, scoped, tag = 'internal scratch']
  %s0 = inlined_call_operand.vmem [shape: f32[2,4,256], index: 0, kind: input, shape index: {}]
  %s1 = inlined_call_operand.vmem [shape: f32[4,2,4], index: 1, kind: input, shape index: {}]
  %s2 = inlined_call_operand.vmem [shape: f32[4,2,1], index: 2, kind: input, shape index: {}]
  %s3 = inlined_call_operand.vmem [shape: f32[4,9,4], index: 3, kind: input, shape index: {}]
  %s4 = inlined_call_operand.vmem [shape: f32[4,9,1], index: 4, kind: input, shape index: {}]
  %s5 = inlined_call_operand.vmem [shape: f32[2,4,2,256], index: 5, kind: output, shape index: {}]
  %s6 = sld [smem:[#allocation0]]
  $region53: #{inv2d_forward.1} parent=0
    _
  %s8 = ssub.s32 1, %s6
  %s9 = scalar_select 0, %s8, %s6
  loop: start=0, step=1, limit=10
  $region2: #{inv2d_forward.1} parent=0 // loop_pre_header
    _
  $region3: #{inv2d_forward.1} parent=0 // loop_header
    %s11 = sphi 0, %s15
    %p12 = scmp.ge.s32.totalorder %s11, 10
    %s18 = sphi 0, %s30
    %s19 = sphi 0, %s26
    %s20 = sphi 0, %s18
    %s21 = sphi 0, %s19
    %s22 = sphi 0, %s20
    %s23 = sphi 0, %s21
    %s33 = sphi 0, %s35
    %s36 = sphi 0, %s33
    %s37 = sphi 0, %s36
    %s53 = sphi 0, %s37
    %s59 = sphi 0, %s61
    %s62 = sphi 0, %s59
    %s63 = sphi 0, %s62
    %s79 = sphi 0, %s63
    %s85 = sphi 0, %s87
    %s88 = sphi 0, %s85
    %s89 = sphi 0, %s88
    %s105 = sphi 0, %s89
    %s111 = sphi 0, %s113
    %s114 = sphi 0, %s111
    %s115 = sphi 0, %s114
    %s131 = sphi 0, %s115
    %s137 = sphi 0, %s139
    %s140 = sphi 0, %s137
    %s141 = sphi 0, %s140
    %s157 = sphi 0, %s141
    %s165 = sphi 0, %s167
    %s168 = sphi 0, %s165
    %s169 = sphi 0, %s168
    %s185 = sphi 0, %s169
  $region4: #{inv2d_forward.1} parent=0 // loop_header_branch
    %14 = sbr.rel (%p12) target = $region8
  $region5: #{inv2d_forward.1} parent=0 // loop_body
    %s16 = ssub.s32 %s11, 1
    %s17 = ssub.s32 %s11, 2
    %s24 = sadd.s32 1, %s19
    %p25 = scmp.ge.s32.totalorder %s24, 4
    %s26 = scalar_select %p25, 0, %s24
    %s27 = sadd.s32 1, %s18
    %s28 = scalar_select %p25, %s27, %s18
    %p29 = scmp.ge.s32.totalorder %s28, 2
    %s30 = scalar_select %p29, 0, %s28
    %s31 = ssub.s32 %s18, %s30
    %p32 = scmp.eq.s32.totalorder %s31, 0
    %s34 = sadd.s32 %s33, 1
    %s35 = scalar_select %p32, %s33, %s34
    %p38 = pneg %p32
    %p39 = scmp.eq.s32.totalorder %s11, 7
    %p40 = por %p38, %p39
    %p41 = scmp.ne.s32.totalorder %s33, %s36
    %p42 = scmp.eq.s32.totalorder %s11, 0
    %p43 = por %p41, %p42
    %p44 = scmp.ne.s32.totalorder %s33, %s36
    %p45 = scmp.eq.s32.totalorder %s16, 7
    %p46 = por %p44, %p45
    %p47 = scmp.ne.s32.totalorder %s36, %s37
    %p48 = scmp.eq.s32.totalorder %s16, 0
    %p49 = por %p47, %p48
    %p50 = scmp.ne.s32.totalorder %s36, %s37
    %p51 = scmp.eq.s32.totalorder %s17, 7
    %p52 = por %p50, %p51
    %p54 = scmp.ne.s32.totalorder %s37, %s53
    %p55 = scmp.eq.s32.totalorder %s17, 0
    %p56 = por %p54, %p55
    %s57 = ssub.s32 %s19, %s26
    %p58 = scmp.eq.s32.totalorder %s57, 0
    %s60 = sadd.s32 %s59, 1
    %s61 = scalar_select %p58, %s59, %s60
    %p64 = pneg %p58
    %p65 = scmp.eq.s32.totalorder %s11, 7
    %p66 = por %p64, %p65
    %p67 = scmp.ne.s32.totalorder %s59, %s62
    %p68 = scmp.eq.s32.totalorder %s11, 0
    %p69 = por %p67, %p68
    %p70 = scmp.ne.s32.totalorder %s59, %s62
    %p71 = scmp.eq.s32.totalorder %s16, 7
    %p72 = por %p70, %p71
    %p73 = scmp.ne.s32.totalorder %s62, %s63
    %p74 = scmp.eq.s32.totalorder %s16, 0
    %p75 = por %p73, %p74
    %p76 = scmp.ne.s32.totalorder %s62, %s63
    %p77 = scmp.eq.s32.totalorder %s17, 7
    %p78 = por %p76, %p77
    %p80 = scmp.ne.s32.totalorder %s63, %s79
    %p81 = scmp.eq.s32.totalorder %s17, 0
    %p82 = por %p80, %p81
    %s83 = ssub.s32 %s19, %s26
    %p84 = scmp.eq.s32.totalorder %s83, 0
    %s86 = sadd.s32 %s85, 1
    %s87 = scalar_select %p84, %s85, %s86
    %p90 = pneg %p84
    %p91 = scmp.eq.s32.totalorder %s11, 7
    %p92 = por %p90, %p91
    %p93 = scmp.ne.s32.totalorder %s85, %s88
    %p94 = scmp.eq.s32.totalorder %s11, 0
    %p95 = por %p93, %p94
    %p96 = scmp.ne.s32.totalorder %s85, %s88
    %p97 = scmp.eq.s32.totalorder %s16, 7
    %p98 = por %p96, %p97
    %p99 = scmp.ne.s32.totalorder %s88, %s89
    %p100 = scmp.eq.s32.totalorder %s16, 0
    %p101 = por %p99, %p100
    %p102 = scmp.ne.s32.totalorder %s88, %s89
    %p103 = scmp.eq.s32.totalorder %s17, 7
    %p104 = por %p102, %p103
    %p106 = scmp.ne.s32.totalorder %s89, %s105
    %p107 = scmp.eq.s32.totalorder %s17, 0
    %p108 = por %p106, %p107
    %s109 = ssub.s32 %s19, %s26
    %p110 = scmp.eq.s32.totalorder %s109, 0
    %s112 = sadd.s32 %s111, 1
    %s113 = scalar_select %p110, %s111, %s112
    %p116 = pneg %p110
    %p117 = scmp.eq.s32.totalorder %s11, 7
    %p118 = por %p116, %p117
    %p119 = scmp.ne.s32.totalorder %s111, %s114
    %p120 = scmp.eq.s32.totalorder %s11, 0
    %p121 = por %p119, %p120
    %p122 = scmp.ne.s32.totalorder %s111, %s114
    %p123 = scmp.eq.s32.totalorder %s16, 7
    %p124 = por %p122, %p123
    %p125 = scmp.ne.s32.totalorder %s114, %s115
    %p126 = scmp.eq.s32.totalorder %s16, 0
    %p127 = por %p125, %p126
    %p128 = scmp.ne.s32.totalorder %s114, %s115
    %p129 = scmp.eq.s32.totalorder %s17, 7
    %p130 = por %p128, %p129
    %p132 = scmp.ne.s32.totalorder %s115, %s131
    %p133 = scmp.eq.s32.totalorder %s17, 0
    %p134 = por %p132, %p133
    %s135 = ssub.s32 %s19, %s26
    %p136 = scmp.eq.s32.totalorder %s135, 0
    %s138 = sadd.s32 %s137, 1
    %s139 = scalar_select %p136, %s137, %s138
    %p142 = pneg %p136
    %p143 = scmp.eq.s32.totalorder %s11, 7
    %p144 = por %p142, %p143
    %p145 = scmp.ne.s32.totalorder %s137, %s140
    %p146 = scmp.eq.s32.totalorder %s11, 0
    %p147 = por %p145, %p146
    %p148 = scmp.ne.s32.totalorder %s137, %s140
    %p149 = scmp.eq.s32.totalorder %s16, 7
    %p150 = por %p148, %p149
    %p151 = scmp.ne.s32.totalorder %s140, %s141
    %p152 = scmp.eq.s32.totalorder %s16, 0
    %p153 = por %p151, %p152
    %p154 = scmp.ne.s32.totalorder %s140, %s141
    %p155 = scmp.eq.s32.totalorder %s17, 7
    %p156 = por %p154, %p155
    %p158 = scmp.ne.s32.totalorder %s141, %s157
    %p159 = scmp.eq.s32.totalorder %s17, 0
    %p160 = por %p158, %p159
    %s161 = ssub.s32 %s18, %s30
    %s162 = ssub.s32 %s19, %s26
    %s163 = sor.u32 %s161, %s162
    %p164 = scmp.eq.s32.totalorder %s163, 0
    %s166 = sadd.s32 %s165, 1
    %s167 = scalar_select %p164, %s165, %s166
    %p170 = pneg %p164
    %p171 = scmp.eq.s32.totalorder %s11, 7
    %p172 = por %p170, %p171
    %p173 = scmp.ne.s32.totalorder %s165, %s168
    %p174 = scmp.eq.s32.totalorder %s11, 0
    %p175 = por %p173, %p174
    %p176 = scmp.ne.s32.totalorder %s165, %s168
    %p177 = scmp.eq.s32.totalorder %s16, 7
    %p178 = por %p176, %p177
    %p179 = scmp.ne.s32.totalorder %s168, %s169
    %p180 = scmp.eq.s32.totalorder %s16, 0
    %p181 = por %p179, %p180
    %p182 = scmp.ne.s32.totalorder %s168, %s169
    %p183 = scmp.eq.s32.totalorder %s17, 7
    %p184 = por %p182, %p183
    %p186 = scmp.ne.s32.totalorder %s169, %s185
    %p187 = scmp.eq.s32.totalorder %s17, 0
    %p188 = por %p186, %p187
    %p189 = scmp.le.s32.totalorder 1, %s11
    %p190 = scmp.lt.s32.totalorder %s11, 9
    %p191 = pnand %p189, %p190
    %p192 = pneg %p191
    // Predicated region
    $region9: #{inv2d_forward.1} parent=5 // pred_check
      _
    $region10: #{inv2d_forward.1} parent=5 // pred_check_branch
      %194 = sbr.rel (%p191) target = $region12
    $region11: #{inv2d_forward.1} parent=5 // pred_region
      %s195 = ssub.s32 %s11, 1
    $region12: #{inv2d_forward.1} parent=5 // pred_fallthru
      _
    %p196 = scmp.lt.s32.totalorder %s11, 8
    // Predicated region
    $region13: #{inv2d_forward.1} parent=5 // pred_check
      %p197 = pneg %p196
    $region14: #{inv2d_forward.1} parent=5 // pred_check_branch
      %199 = sbr.rel (%p197) target = $region16
    $region15: #{inv2d_forward.1} parent=5 // pred_region
      // Predicated region
      $region17: #{inv2d_forward.1} parent=15 // pred_check
        %p200 = pneg %p43
      $region18: #{inv2d_forward.1} parent=15 // pred_check_branch
        %202 = sbr.rel (%p200) target = $region20
      $region19: #{inv2d_forward.1} parent=15 // pred_region
        %p203 = scmp.lt.s32.totalorder %s18, 1
        %s204 = scalar_select %p203, %s18, 1
        %s205 = smul.addr %s204, 2
        %s206 = smul.addr %s205, 4
        %s207 = scalar_lea.vmem %s0, %s206
      $region20: #{inv2d_forward.1} parent=15 // pred_fallthru
        _
      // Predicated region
      $region21: #{inv2d_forward.1} parent=15 // pred_check
        %p208 = pneg %p69
      $region22: #{inv2d_forward.1} parent=15 // pred_check_branch
        %210 = sbr.rel (%p208) target = $region24
      $region23: #{inv2d_forward.1} parent=15 // pred_region
        %p211 = scmp.lt.s32.totalorder %s19, 3
        %s212 = scalar_select %p211, %s19, 3
        %s213 = smul.addr %s212, 2
        %s214 = scalar_lea.vmem %s1, %s213
      $region24: #{inv2d_forward.1} parent=15 // pred_fallthru
        _
      // Predicated region
      $region25: #{inv2d_forward.1} parent=15 // pred_check
        %p215 = pneg %p95
      $region26: #{inv2d_forward.1} parent=15 // pred_check_branch
        %217 = sbr.rel (%p215) target = $region28
      $region27: #{inv2d_forward.1} parent=15 // pred_region
        %p218 = scmp.lt.s32.totalorder %s19, 3
        %s219 = scalar_select %p218, %s19, 3
        %s220 = smul.addr %s219, 2
        %s221 = scalar_lea.vmem %s2, %s220
      $region28: #{inv2d_forward.1} parent=15 // pred_fallthru
        _
      // Predicated region
      $region29: #{inv2d_forward.1} parent=15 // pred_check
        %p222 = pneg %p121
      $region30: #{inv2d_forward.1} parent=15 // pred_check_branch
        %224 = sbr.rel (%p222) target = $region32
      $region31: #{inv2d_forward.1} parent=15 // pred_region
        %p225 = scmp.lt.s32.totalorder %s19, 3
        %s226 = scalar_select %p225, %s19, 3
        %s227 = smul.addr %s226, 2
        %s228 = smul.addr %s227, 8
        %s229 = scalar_lea.vmem %s3, %s228
      $region32: #{inv2d_forward.1} parent=15 // pred_fallthru
        _
      // Predicated region
      $region33: #{inv2d_forward.1} parent=15 // pred_check
        %p230 = pneg %p147
      $region34: #{inv2d_forward.1} parent=15 // pred_check_branch
        %232 = sbr.rel (%p230) target = $region36
      $region35: #{inv2d_forward.1} parent=15 // pred_region
        %p233 = scmp.lt.s32.totalorder %s19, 3
        %s234 = scalar_select %p233, %s19, 3
        %s235 = smul.addr %s234, 2
        %s236 = smul.addr %s235, 8
        %s237 = scalar_lea.vmem %s4, %s236
      $region36: #{inv2d_forward.1} parent=15 // pred_fallthru
        _
    $region16: #{inv2d_forward.1} parent=5 // pred_fallthru
      _
    %p238 = scmp.le.s32.totalorder 1, %s11
    %p239 = scmp.lt.s32.totalorder %s11, 9
    %p240 = pnand %p238, %p239
    %p241 = pneg %p240
    // Predicated region
    $region37: #{inv2d_forward.1} parent=5 // pred_check
      _
    $region38: #{inv2d_forward.1} parent=5 // pred_check_branch
      %243 = sbr.rel (%p240) target = $region40
    $region39: #{inv2d_forward.1} parent=5 // pred_region
      %s244 = ssub.s32 %s11, 1
      %p245 = scmp.lt.s32.totalorder %s20, 1
      %s246 = scalar_select %p245, %s20, 1
      %s247 = smul.addr %s246, 2
      %s248 = smul.addr %s247, 4
      %s249 = scalar_lea.vmem %s0, %s248
      %p250 = pneg %p49
      %p251 = pneg %p46
      %p252 = scmp.lt.s32.totalorder %s21, 3
      %s253 = scalar_select %p252, %s21, 3
      %s254 = smul.addr %s253, 2
      %s255 = scalar_lea.vmem %s1, %s254
      %p256 = pneg %p75
      %p257 = pneg %p72
      %p258 = scmp.lt.s32.totalorder %s21, 3
      %s259 = scalar_select %p258, %s21, 3
      %s260 = smul.addr %s259, 2
      %s261 = scalar_lea.vmem %s2, %s260
      %p262 = pneg %p101
      %p263 = pneg %p98
      %p264 = scmp.lt.s32.totalorder %s21, 3
      %s265 = scalar_select %p264, %s21, 3
      %s266 = smul.addr %s265, 2
      %s267 = smul.addr %s266, 8
      %s268 = scalar_lea.vmem %s3, %s267
      %p269 = pneg %p127
      %p270 = pneg %p124
      %p271 = scmp.lt.s32.totalorder %s21, 3
      %s272 = scalar_select %p271, %s21, 3
      %s273 = smul.addr %s272, 2
      %s274 = smul.addr %s273, 8
      %s275 = scalar_lea.vmem %s4, %s274
      %p276 = pneg %p153
      %p277 = pneg %p150
      %p278 = pneg %p181
      %p279 = pneg %p178
      %p280 = scmp.lt.s32.totalorder %s20, 1
      %s281 = scalar_select %p280, %s20, 1
      %p282 = scmp.lt.s32.totalorder %s21, 3
      %s283 = scalar_select %p282, %s21, 3
      %s284 = smul.addr %s283, 2
      %s285 = smul.addr %s281, 8
      %s286 = sadd.s32 %s284, %s285
      %s287 = smul.addr %s286, 2
      %s288 = scalar_lea.vmem %s5, %s287
      %p289 = scmp.lt.s32.totalorder %s20, 1
      %s290 = scalar_select %p289, %s20, 1
      %s291 = smul.addr %s290, 2
      %s292 = smul.addr %s291, 4
      %s293 = scalar_lea.vmem %s0, %s292
      %p294 = scmp.lt.s32.totalorder %s21, 3
      %s295 = scalar_select %p294, %s21, 3
      %s296 = smul.addr %s295, 2
      %s297 = scalar_lea.vmem %s1, %s296
      %p298 = scmp.lt.s32.totalorder %s21, 3
      %s299 = scalar_select %p298, %s21, 3
      %s300 = smul.addr %s299, 2
      %s301 = scalar_lea.vmem %s2, %s300
      %p302 = scmp.lt.s32.totalorder %s21, 3
      %s303 = scalar_select %p302, %s21, 3
      %s304 = smul.addr %s303, 2
      %s305 = smul.addr %s304, 8
      %s306 = scalar_lea.vmem %s3, %s305
      %p307 = scmp.lt.s32.totalorder %s21, 3
      %s308 = scalar_select %p307, %s21, 3
      %s309 = smul.addr %s308, 2
      %s310 = smul.addr %s309, 8
      %s311 = scalar_lea.vmem %s4, %s310
      %p312 = scmp.lt.s32.totalorder %s20, 1
      %s313 = scalar_select %p312, %s20, 1
      %p314 = scmp.lt.s32.totalorder %s21, 3
      %s315 = scalar_select %p314, %s21, 3
      %s316 = smul.addr %s315, 2
      %s317 = smul.addr %s313, 8
      %s318 = sadd.s32 %s316, %s317
      %s319 = smul.addr %s318, 2
      %s320 = scalar_lea.vmem %s5, %s319
      %v321 = vld [vmem:[%s293] sm:$0xff]
      %v322 = vld [vmem:[%s297] sm:$0x3]
      %v323 = vld [vmem:[%s301] sm:$0x3]
      %325 = vset.pattern.permute.xlu0 0
      %326 = vperm.xlu0 %325, %v323
      %v327 = vpop.permute.xlu0 %326
      %330 = vst [vmem:[#allocation1] ss:$2 sm:$0xff] %v321
      %v331 = vld.sshfl [vmem:[#allocation1] sm:$0xff pattern:$0x75316420]
      %v332 = vld.sshfl [vmem:[#allocation1 + $0x8] sm:$0xff pattern:$0x75316420]
      %vm333 = vcmask 31744
      %v335 = vsel %vm333, %v322, 0
      %vm337 = vcmask 1043456
      %v338 = vsel %vm337, %v331, 0
      %v340 = vsel %vm337, %v332, 0
      %342 = vmatpush.msra.mxu0 0.0
      %343 = vmatpush.msra.mxu0 0.0
      %344 = vmatpush.msra.mxu0 0.0
      %345 = vmatpush.msra.mxu0 0.0
      %346 = vmatpush.msra.mxu0 0.0
      %347 = vmatpush.msra.mxu0 0.0
      %348 = vmatpush.msra.mxu0 0.0
      %349 = vmatpush.msra.mxu0 0.0
      %350 = vmatpush.msra.mxu0 0.0
      %351 = vmatpush.msra.mxu0 0.0
      %352 = vmatpush.msra.mxu0 0.0
      %353 = vmatpush.msra.mxu0 0.0
      %354 = vmatpush.msra.mxu0 0.0
      %355 = vmatpush.msra.mxu0 0.0
      %356 = vmatpush.msra.mxu0 0.0
      %357 = vmatpush.msra.mxu0 %v338
      %358 = vmatmul.f32.gmra.mxu0 %v335
      %v359 = vpop.f32.mrf.mxu0
      %v360 = vadd.f32 %v327, %v359
      %361 = vdwg.mxu0
      %362 = vmatpush.msra.mxu0 0.0
      %363 = vmatpush.msra.mxu0 0.0
      %364 = vmatpush.msra.mxu0 0.0
      %365 = vmatpush.msra.mxu0 0.0
      %366 = vmatpush.msra.mxu0 0.0
      %367 = vmatpush.msra.mxu0 0.0
      %368 = vmatpush.msra.mxu0 0.0
      %369 = vmatpush.msra.mxu0 0.0
      %370 = vmatpush.msra.mxu0 0.0
      %371 = vmatpush.msra.mxu0 0.0
      %372 = vmatpush.msra.mxu0 0.0
      %373 = vmatpush.msra.mxu0 0.0
      %374 = vmatpush.msra.mxu0 0.0
      %375 = vmatpush.msra.mxu0 0.0
      %376 = vmatpush.msra.mxu0 0.0
      %377 = vmatpush.msra.mxu0 %v340
      %378 = vmatmul.f32.gmra.mxu0 %v335
      %v379 = vpop.f32.mrf.mxu0
      %v380 = vadd.f32 %v327, %v379
      %381 = vdwg.mxu0
      %v382 = vld [vmem:[%s306] sm:$0xff]
      %v383 = vld [vmem:[%s306 + $0x8] sm:$0x1]
      %v384 = vld [vmem:[%s311] sm:$0xff]
      %v385 = vld [vmem:[%s311 + $0x8] sm:$0x1]
      %387 = vset.pattern.permute.xlu0 0
      %388 = vperm.xlu0 %387, %v384
      %v389 = vpop.permute.xlu0 %388
      %392 = vset.pattern.permute.xlu0 0
      %393 = vperm.xlu0 %392, %v385
      %v394 = vpop.permute.xlu0 %393
      %396 = vst [vmem:[#allocation1] ss:$2 sm:$0xff] %v321
      %v397 = vld.sshfl [vmem:[#allocation1] sm:$0xff pattern:$0x75316420]
      %v398 = vld.sshfl [vmem:[#allocation1 + $0x8] sm:$0xff pattern:$0x75316420]
      %v400 = vsel %vm333, %v382, 0
      %v403 = vsel %vm333, %v383, 0
      %v405 = vsel %vm337, %v397, 0
      %v407 = vsel %vm337, %v398, 0
      %409 = vmatpush.msra.mxu0 0.0
      %410 = vmatpush.msra.mxu0 0.0
      %411 = vmatpush.msra.mxu0 0.0
      %412 = vmatpush.msra.mxu0 0.0
      %413 = vmatpush.msra.mxu0 0.0
      %414 = vmatpush.msra.mxu0 0.0
      %415 = vmatpush.msra.mxu0 0.0
      %416 = vmatpush.msra.mxu0 0.0
      %417 = vmatpush.msra.mxu0 0.0
      %418 = vmatpush.msra.mxu0 0.0
      %419 = vmatpush.msra.mxu0 0.0
      %420 = vmatpush.msra.mxu0 0.0
      %421 = vmatpush.msra.mxu0 0.0
      %422 = vmatpush.msra.mxu0 0.0
      %423 = vmatpush.msra.mxu0 0.0
      %424 = vmatpush.msra.mxu0 %v405
      %425 = vmatmul.f32.gmra.mxu0 %v400
      %v426 = vpop.f32.mrf.mxu0
      %v427 = vadd.f32 %v389, %v426
      %428 = vmatmul.f32.gmra.mxu0 %v403
      %v429 = vpop.f32.mrf.mxu0
      %v430 = vadd.f32 %v394, %v429
      %431 = vdwg.mxu0
      %432 = vmatpush.msra.mxu0 0.0
      %433 = vmatpush.msra.mxu0 0.0
      %434 = vmatpush.msra.mxu0 0.0
      %435 = vmatpush.msra.mxu0 0.0
      %436 = vmatpush.msra.mxu0 0.0
      %437 = vmatpush.msra.mxu0 0.0
      %438 = vmatpush.msra.mxu0 0.0
      %439 = vmatpush.msra.mxu0 0.0
      %440 = vmatpush.msra.mxu0 0.0
      %441 = vmatpush.msra.mxu0 0.0
      %442 = vmatpush.msra.mxu0 0.0
      %443 = vmatpush.msra.mxu0 0.0
      %444 = vmatpush.msra.mxu0 0.0
      %445 = vmatpush.msra.mxu0 0.0
      %446 = vmatpush.msra.mxu0 0.0
      %447 = vmatpush.msra.mxu0 %v407
      %448 = vmatmul.f32.gmra.mxu0 %v400
      %v449 = vpop.f32.mrf.mxu0
      %v450 = vadd.f32 %v389, %v449
      %451 = vmatmul.f32.gmra.mxu0 %v403
      %v452 = vpop.f32.mrf.mxu0
      %v453 = vadd.f32 %v394, %v452
      %454 = vdwg.mxu0
      %v455 = vlaneseq
      %v456 = vand.u32 %v455, 127
      %v457 = vadd.s32 %v456, 128
      %vm458 = vcmp.lt.s32.totalorder %v456, 0
      %v459 = vsub.s32 0, %v456
      %v460 = vsel %vm458, %v459, %v456
      %v461 = vshrl.u32 %v460, 4
      %v462 = vand.u32 %v460, 15
      %v463 = vsub.s32 0, %v462
      %v464 = vsel %vm458, %v463, %v462
      %vm465 = vcmp.lt.s32.totalorder %v457, 0
      %v466 = vsub.s32 0, %v457
      %v467 = vsel %vm465, %v466, %v457
      %v468 = vshrl.u32 %v467, 4
      %v469 = vand.u32 %v467, 15
      %v470 = vsub.s32 0, %v469
      %v471 = vsel %vm465, %v470, %v469
      %vm472 = vcmp.ne.s32.totalorder %v464, 0
      %vm473 = vcmp.ne.s32.totalorder %v471, 0
      %vm474 = vcmp.lt.s32.totalorder %v464, 0
      %vm475 = vcmp.lt.s32.totalorder %v471, 0
      %vm476 = vmand %vm474, %vm472
      %vm477 = vmand %vm475, %vm473
      %v478 = vadd.s32 %v464, 16
      %v479 = vadd.s32 %v471, 16
      %v480 = vsel %vm476, %v478, %v464
      %v481 = vsel %vm477, %v479, %v471
      %482 = vrot.lane.b32.xlu0 %v360, 127
      %v483 = vpop.permute.xlu0 %482
      %484 = vrot.lane.b32.xlu0 %v380, 127
      %v485 = vpop.permute.xlu0 %484
      %vm486 = vcmp.lt.s32.totalorder %v456, 127
      %v487 = vsel %vm486, %v483, %v485
      %v488 = vsel %vm486, %v485, %v483
      %489 = vrot.lane.b32.xlu0 %v360, 15
      %v490 = vpop.permute.xlu0 %489
      %491 = vrot.lane.b32.xlu0 %v380, 15
      %v492 = vpop.permute.xlu0 %491
      %vm493 = vcmp.lt.s32.totalorder %v456, 15
      %v494 = vsel %vm493, %v490, %v492
      %v495 = vsel %vm493, %v492, %v490
      %vm496 = vcmp.ge.s32.totalorder %v480, 15
      %vm497 = vcmp.ge.s32.totalorder %v481, 15
      %v498 = vsel %vm496, 1, 0
      %v499 = vsel %vm497, 1, 0
      %vm500 = vcmp.eq.s32.totalorder %v498, 1
      %vm501 = vcmp.eq.s32.totalorder %v499, 1
      %v502 = vsel %vm500, %v495, %v487
      %v503 = vsel %vm501, %v494, %v488
      %504 = vrot.lane.b32.xlu0 %v360, 1
      %v505 = vpop.permute.xlu0 %504
      %506 = vrot.lane.b32.xlu0 %v380, 1
      %v507 = vpop.permute.xlu0 %506
      %vm508 = vcmp.lt.s32.totalorder %v456, 1
      %v509 = vsel %vm508, %v505, %v507
      %v510 = vsel %vm508, %v507, %v505
      %511 = vrot.lane.b32.xlu0 %v360, 113
      %v512 = vpop.permute.xlu0 %511
      %513 = vrot.lane.b32.xlu0 %v380, 113
      %v514 = vpop.permute.xlu0 %513
      %vm515 = vcmp.lt.s32.totalorder %v456, 113
      %v516 = vsel %vm515, %v512, %v514
      %v517 = vsel %vm515, %v514, %v512
      %vm518 = vcmp.lt.s32.totalorder %v480, 1
      %vm519 = vcmp.lt.s32.totalorder %v481, 1
      %v520 = vsel %vm518, 1, 0
      %v521 = vsel %vm519, 1, 0
      %vm522 = vcmp.eq.s32.totalorder %v520, 1
      %vm523 = vcmp.eq.s32.totalorder %v521, 1
      %v524 = vsel %vm522, %v516, %v510
      %v525 = vsel %vm523, %v517, %v509
      %526 = vrot.lane.b32.xlu0 %v524, 16
      %v527 = vpop.permute.xlu0 %526
      %528 = vrot.lane.b32.xlu0 %v525, 16
      %v529 = vpop.permute.xlu0 %528
      %vm530 = vcmp.lt.s32.totalorder %v456, 16
      %v531 = vsel %vm530, %v527, %v529
      %v532 = vsel %vm530, %v529, %v527
      %v533 = vperm.slane %v427, 0
      %v534 = vperm.slane %v450, 0
      %v535 = vmul.f32 %v533, %v532
      %v536 = vmul.f32 %v534, %v531
      %v537 = vadd.f32 %v535, 0.0
      %v538 = vadd.f32 %v536, 0.0
      %539 = vrot.lane.b32.xlu0 %v360, 16
      %v540 = vpop.permute.xlu0 %539
      %541 = vrot.lane.b32.xlu0 %v380, 16
      %v542 = vpop.permute.xlu0 %541
      %v543 = vsel %vm530, %v540, %v542
      %v544 = vsel %vm530, %v542, %v540
      %v545 = vperm.slane %v427, 1
      %v546 = vperm.slane %v450, 1
      %v547 = vmul.f32 %v545, %v544
      %v548 = vmul.f32 %v546, %v543
      %v549 = vadd.f32 %v537, %v547
      %v550 = vadd.f32 %v538, %v548
      %551 = vrot.lane.b32.xlu0 %v502, 16
      %v552 = vpop.permute.xlu0 %551
      %553 = vrot.lane.b32.xlu0 %v503, 16
      %v554 = vpop.permute.xlu0 %553
      %v555 = vsel %vm530, %v552, %v554
      %v556 = vsel %vm530, %v554, %v552
      %v557 = vperm.slane %v427, 2
      %v558 = vperm.slane %v450, 2
      %v559 = vmul.f32 %v557, %v556
      %v560 = vmul.f32 %v558, %v555
      %v561 = vadd.f32 %v549, %v559
      %v562 = vadd.f32 %v550, %v560
      %v563 = vperm.slane %v427, 3
      %v564 = vperm.slane %v450, 3
      %v565 = vmul.f32 %v563, %v524
      %v566 = vmul.f32 %v564, %v525
      %v567 = vadd.f32 %v561, %v565
      %v568 = vadd.f32 %v562, %v566
      %v569 = vperm.slane %v427, 4
      %v570 = vperm.slane %v450, 4
      %v571 = vmul.f32 %v569, %v360
      %v572 = vmul.f32 %v570, %v380
      %v573 = vadd.f32 %v567, %v571
      %v574 = vadd.f32 %v568, %v572
      %v575 = vperm.slane %v427, 5
      %v576 = vperm.slane %v450, 5
      %v577 = vmul.f32 %v575, %v502
      %v578 = vmul.f32 %v576, %v503
      %v579 = vadd.f32 %v573, %v577
      %v580 = vadd.f32 %v574, %v578
      %581 = vrot.lane.b32.xlu0 %v524, 112
      %v582 = vpop.permute.xlu0 %581
      %583 = vrot.lane.b32.xlu0 %v525, 112
      %v584 = vpop.permute.xlu0 %583
      %vm585 = vcmp.lt.s32.totalorder %v456, 112
      %v586 = vsel %vm585, %v582, %v584
      %v587 = vsel %vm585, %v584, %v582
      %v588 = vperm.slane %v427, 6
      %v589 = vperm.slane %v450, 6
      %v590 = vmul.f32 %v588, %v586
      %v591 = vmul.f32 %v589, %v587
      %v592 = vadd.f32 %v579, %v590
      %v593 = vadd.f32 %v580, %v591
      %594 = vrot.lane.b32.xlu0 %v360, 112
      %v595 = vpop.permute.xlu0 %594
      %596 = vrot.lane.b32.xlu0 %v380, 112
      %v597 = vpop.permute.xlu0 %596
      %v598 = vsel %vm585, %v595, %v597
      %v599 = vsel %vm585, %v597, %v595
      %v600 = vperm.slane %v427, 7
      %v601 = vperm.slane %v450, 7
      %v602 = vmul.f32 %v600, %v598
      %v603 = vmul.f32 %v601, %v599
      %v604 = vadd.f32 %v592, %v602
      %v605 = vadd.f32 %v593, %v603
      %606 = vrot.lane.b32.xlu0 %v502, 112
      %v607 = vpop.permute.xlu0 %606
      %608 = vrot.lane.b32.xlu0 %v503, 112
      %v609 = vpop.permute.xlu0 %608
      %v610 = vsel %vm585, %v607, %v609
      %v611 = vsel %vm585, %v609, %v607
      %v612 = vperm.slane %v430, 0
      %v613 = vperm.slane %v453, 0
      %v614 = vmul.f32 %v612, %v610
      %v615 = vmul.f32 %v613, %v611
      %v616 = vadd.f32 %v604, %v614
      %v617 = vadd.f32 %v605, %v615
      %v620 = vrot.slane %v617, 6
      %vm621 = vcmask 1041408
      %v622 = vsel %vm621, %v616, %v620
      %624 = vst [vmem:[%s320] sm:$0xf] %v622
      %p625 = scmp.lt.s32.totalorder %s20, 1
      %s626 = scalar_select %p625, %s20, 1
      %p627 = scmp.lt.s32.totalorder %s21, 3
      %s628 = scalar_select %p627, %s21, 3
      %s629 = smul.addr %s628, 2
      %s630 = smul.addr %s626, 8
      %s631 = sadd.s32 %s629, %s630
      %s632 = smul.addr %s631, 2
      %s633 = scalar_lea.vmem %s5, %s632
      // Predicated region
      $region41: #{inv2d_forward.1} parent=39 // pred_check
        %p634 = pneg %p178
      $region42: #{inv2d_forward.1} parent=39 // pred_check_branch
        %636 = sbr.rel (%p634) target = $region44
      $region43: #{inv2d_forward.1} parent=39 // pred_region
        _
      $region44: #{inv2d_forward.1} parent=39 // pred_fallthru
        _
    $region40: #{inv2d_forward.1} parent=5 // pred_fallthru
      _
    %p637 = scmp.le.s32.totalorder 2, %s11
    // Predicated region
    $region45: #{inv2d_forward.1} parent=5 // pred_check
      %p638 = pneg %p637
    $region46: #{inv2d_forward.1} parent=5 // pred_check_branch
      %640 = sbr.rel (%p638) target = $region48
    $region47: #{inv2d_forward.1} parent=5 // pred_region
      %s641 = ssub.s32 %s11, 2
      // Predicated region
      $region49: #{inv2d_forward.1} parent=47 // pred_check
        %p642 = pneg %p184
      $region50: #{inv2d_forward.1} parent=47 // pred_check_branch
        %644 = sbr.rel (%p642) target = $region52
      $region51: #{inv2d_forward.1} parent=47 // pred_region
        %p645 = scmp.lt.s32.totalorder %s22, 1
        %s646 = scalar_select %p645, %s22, 1
        %p647 = scmp.lt.s32.totalorder %s23, 3
        %s648 = scalar_select %p647, %s23, 3
        %s649 = smul.addr %s648, 2
        %s650 = smul.addr %s646, 8
        %s651 = sadd.s32 %s649, %s650
        %s652 = smul.addr %s651, 2
        %s653 = scalar_lea.vmem %s5, %s652
      $region52: #{inv2d_forward.1} parent=47 // pred_fallthru
        _
    $region48: #{inv2d_forward.1} parent=5 // pred_fallthru
      _
  $region6: #{inv2d_forward.1} parent=0 // loop_footer
    %s15 = sadd.s32 1, %s11
  $region7: #{inv2d_forward.1} parent=0 // loop_footer_branch
    %10 = sbr.rel target = $region3
  $region8: #{inv2d_forward.1} parent=0 // loop_exit
    _

</llo_original>
